<compile_context>
chip_gen: v6e
topology: v6e:2x2x1
jax: 0.10.0
libtpu: 0.0.40
codegen_flags: <defaults>
</compile_context>

<pallas_src>
import functools

import jax
import jax.numpy as jnp
from jax.experimental import pallas as pl
from jax.experimental.pallas import tpu as pltpu


def _margin_hn_kernel(a_ref, p_ref, n_ref, o_ref, *, alpha, valid_rows):
    tb = a_ref.shape[0]

    # f32 compute regardless of input dtype.
    a = a_ref[...].astype(jnp.float32)
    p = p_ref[...].astype(jnp.float32)
    n = n_ref[...].astype(jnp.float32)

    dp = a - p
    dn = a - n
    # Per-row squared-distance reductions over the feature (lane) axis.
    p_sq = jnp.sum(dp * dp, axis=1, keepdims=True)   # (tb, 1)
    n_sq = jnp.sum(dn * dn, axis=1, keepdims=True)   # (tb, 1)
    p_dist = jnp.sqrt(p_sq)
    n_dist = jnp.sqrt(n_sq)

    normal_loss = jnp.maximum(p_dist - n_dist + jnp.float32(alpha), 0.0)
    loss = jnp.where(n_dist < p_dist, n_dist, normal_loss)   # (tb, 1)

    # The last grid step may overrun the batch (no wrapper-side padding).
    # Overrun rows hold unspecified data; this select zeroes them (important:
    # relu(alpha) > 0 for all-zero rows, and NaN/Inf in garbage rows is
    # discarded by the select).
    row_ids = (pl.program_id(0) * tb
               + jax.lax.broadcasted_iota(jnp.int32, (tb, 1), 0))
    loss = jnp.where(row_ids < valid_rows, loss, 0.0)

    # Lane-dense per-tile partial: splat the scalar across one 128-lane row.
    # The wrapper reads lane 0 of each tile and sums.
    o_ref[...] = jnp.full((1, 1, 128), jnp.sum(loss), dtype=jnp.float32)


def _choose_batch_tile(B, D, dtype):
    """Batch tile targeting ~1 MiB f32-equivalent input blocks, >=2 grid steps."""
    itemsize = jnp.dtype(dtype).itemsize
    # Sublane alignment: 8 rows for 32-bit types, 16 for 16-bit (bf16 packing).
    align = 8 if itemsize >= 4 else 16
    if B <= align:
        return B                       # full-extent batch block: always legal

    # ~1 MiB of f32-equivalent data per input block. Measured Pallas data
    # shows ~85% of the HBM roofline is already reached well below this; a
    # bigger block only raises VMEM/vreg pressure.
    tb = (1 << 20) // max(4 * D, 1)
    tb = max(align, (tb // align) * align)

    # Guarantee >= 2 grid steps so ("parallel",) can use both v7x TensorCores
    # and the pipeline has steps to overlap.
    half = pl.cdiv(pl.cdiv(B, 2), align) * align
    tb = min(tb, half)

    # Never tile past the (aligned) batch.
    tb = min(tb, pl.cdiv(B, align) * align)
    return int(tb)


def margin_hn_loss(a_embed, p_embed, n_embed, alpha):
    """Pallas TPU implementation of MarginHnLoss.forward. Returns a scalar f32."""
    assert a_embed.shape == p_embed.shape == n_embed.shape
    assert a_embed.dtype == p_embed.dtype == n_embed.dtype
    B, D = a_embed.shape
    itemsize = jnp.dtype(a_embed.dtype).itemsize

    tb = _choose_batch_tile(B, D, a_embed.dtype)
    num_tiles = pl.cdiv(B, tb)

    # Inputs: (tb, D) blocks; last dim is the full array extent D (no lane
    # padding, legal for any D). No jnp.pad copies anywhere.
    in_spec = pl.BlockSpec((tb, D), lambda i: (i, 0))
    out_spec = pl.BlockSpec((1, 1, 128), lambda i: (i, 0, 0))

    # VMEM budget: 3 inputs x 2 pipeline buffers + ~8 f32 temporaries per
    # block (casts, dp, dn, squares) + slack; clamp to <= 32 MiB so it is
    # safe on v7x's 64 MiB as well as v5e/v6e.
    block_bytes = tb * D * itemsize
    vmem_limit = int(min(max(6 * block_bytes + 8 * tb * D * 4 + (2 << 20),
                             16 << 20),
                         32 << 20))

    kernel = functools.partial(_margin_hn_kernel,
                               alpha=float(alpha), valid_rows=B)

    partials = pl.pallas_call(
        kernel,
        out_shape=jax.ShapeDtypeStruct((num_tiles, 1, 128), jnp.float32),
        grid_spec=pltpu.PrefetchScalarGridSpec(
            num_scalar_prefetch=0,
            grid=(num_tiles,),
            in_specs=[in_spec, in_spec, in_spec],
            out_specs=out_spec,
        ),
        compiler_params=pltpu.CompilerParams(
            # Independent per-tile partial sums -> shard across both v7x
            # TensorCores; neutral on single-TC v5e/v6e.
            dimension_semantics=("parallel",),
            vmem_limit_bytes=vmem_limit,
        ),
    )(a_embed, p_embed, n_embed)

    # Tiny final reduction of one scalar per tile.
    return jnp.sum(partials[:, 0, 0])


def margin_hn_loss_ref(a_embed, p_embed, n_embed, alpha):
    """Plain-JAX reference mirroring the PyTorch module (f32 compute)."""
    a = a_embed.astype(jnp.float32)
    p = p_embed.astype(jnp.float32)
    n = n_embed.astype(jnp.float32)
    p_dist = jnp.sqrt(jnp.sum((a - p) ** 2, axis=1))
    n_dist = jnp.sqrt(jnp.sum((a - n) ** 2, axis=1))
    normal_loss = jax.nn.relu(p_dist - n_dist + alpha)
    return jnp.sum(jnp.where(n_dist < p_dist, n_dist, normal_loss))


if __name__ == "__main__":
    alpha = 0.2
    key = jax.random.PRNGKey(0)

    # Case 1: small shapes from the spec (B=8, D=32), f32, single tile.
    B, D = 8, 32
    ka, kp, kn = jax.random.split(key, 3)
    a_embed = jax.random.normal(ka, (B, D), dtype=jnp.float32)
    p_embed = jax.random.normal(kp, (B, D), dtype=jnp.float32)
    n_embed = jax.random.normal(kn, (B, D), dtype=jnp.float32)
    out = jax.block_until_ready(margin_hn_loss(a_embed, p_embed, n_embed, alpha))
    ref = margin_hn_loss_ref(a_embed, p_embed, n_embed, alpha)
    assert jnp.allclose(out, ref, rtol=1e-5, atol=1e-4), (out, ref)

    # Case 2: B not divisible by the tile, D not a multiple of 128
    # (exercises the overrunning last block + full-extent feature block), f32.
    B2, D2 = 37, 96
    ka2, kp2, kn2 = jax.random.split(jax.random.PRNGKey(1), 3)
    a2 = jax.random.normal(ka2, (B2, D2), dtype=jnp.float32)
    p2 = jax.random.normal(kp2, (B2, D2), dtype=jnp.float32)
    n2 = jax.random.normal(kn2, (B2, D2), dtype=jnp.float32)
    out2 = jax.block_until_ready(margin_hn_loss(a2, p2, n2, alpha))
    ref2 = margin_hn_loss_ref(a2, p2, n2, alpha)
    assert jnp.allclose(out2, ref2, rtol=1e-5, atol=1e-4), (out2, ref2)

    # Case 3: larger ragged batch, D a multiple of 128, f32 (2 grid tiles).
    B3, D3 = 300, 256
    ka3, kp3, kn3 = jax.random.split(jax.random.PRNGKey(2), 3)
    a3 = jax.random.normal(ka3, (B3, D3), dtype=jnp.float32)
    p3 = jax.random.normal(kp3, (B3, D3), dtype=jnp.float32)
    n3 = jax.random.normal(kn3, (B3, D3), dtype=jnp.float32)
    out3 = jax.block_until_ready(margin_hn_loss(a3, p3, n3, alpha))
    ref3 = margin_hn_loss_ref(a3, p3, n3, alpha)
    assert jnp.allclose(out3, ref3, rtol=1e-5, atol=1e-3), (out3, ref3)

    # Case 4: bf16 inputs (half the HBM traffic), ragged batch, f32 compute.
    a4 = a2.astype(jnp.bfloat16)
    p4 = p2.astype(jnp.bfloat16)
    n4 = n2.astype(jnp.bfloat16)
    out4 = jax.block_until_ready(margin_hn_loss(a4, p4, n4, alpha))
    ref4 = margin_hn_loss_ref(a4, p4, n4, alpha)
    assert jnp.allclose(out4, ref4, rtol=1e-5, atol=1e-3), (out4, ref4)

    print("KERNEL_OK")
</pallas_src>

<mosaic_0001>
module attributes {stable_mosaic.version = 11 : i64} {
  func.func @_margin_hn_kernel(%arg0: i32, %arg1: memref<8x32xf32, #tpu.memory_space<vmem>>, %arg2: memref<8x32xf32, #tpu.memory_space<vmem>>, %arg3: memref<8x32xf32, #tpu.memory_space<vmem>>, %arg4: memref<1x1x128xf32, #tpu.memory_space<vmem>>) attributes {dimension_semantics = [#tpu.dimension_semantics<parallel>], iteration_bounds = array<i64: 1>, scalar_prefetch = 0 : i64, scratch_operands = 0 : i64, tpu.core_type = #tpu.core_type<tc>, window_params = [{transform_indices = @transform_0, window_bounds = array<i64: 8, 32>}, {transform_indices = @transform_1, window_bounds = array<i64: 8, 32>}, {transform_indices = @transform_2, window_bounds = array<i64: 8, 32>}, {transform_indices = @transform_3, window_bounds = array<i64: 1, 1, 128>}]} {
    %c0 = arith.constant 0 : index
    %c0_0 = arith.constant 0 : index
    %0 = vector.load %arg1[%c0, %c0_0] : memref<8x32xf32, #tpu.memory_space<vmem>>, vector<8x32xf32>
    %c0_1 = arith.constant 0 : index
    %c0_2 = arith.constant 0 : index
    %1 = vector.load %arg2[%c0_1, %c0_2] : memref<8x32xf32, #tpu.memory_space<vmem>>, vector<8x32xf32>
    %c0_3 = arith.constant 0 : index
    %c0_4 = arith.constant 0 : index
    %2 = vector.load %arg3[%c0_3, %c0_4] : memref<8x32xf32, #tpu.memory_space<vmem>>, vector<8x32xf32>
    %3 = arith.subf %0, %1 : vector<8x32xf32>
    %4 = arith.subf %0, %2 : vector<8x32xf32>
    %5 = arith.mulf %3, %3 : vector<8x32xf32>
    %cst = arith.constant dense<0.000000e+00> : vector<8xf32>
    %6 = vector.multi_reduction <add>, %5, %cst [1] : vector<8x32xf32> to vector<8xf32>
    %7 = vector.shape_cast %6 : vector<8xf32> to vector<8x1xf32>
    %8 = arith.mulf %4, %4 : vector<8x32xf32>
    %cst_5 = arith.constant dense<0.000000e+00> : vector<8xf32>
    %9 = vector.multi_reduction <add>, %8, %cst_5 [1] : vector<8x32xf32> to vector<8xf32>
    %10 = vector.shape_cast %9 : vector<8xf32> to vector<8x1xf32>
    %11 = math.sqrt %7 : vector<8x1xf32>
    %12 = math.sqrt %10 : vector<8x1xf32>
    %13 = arith.subf %11, %12 : vector<8x1xf32>
    %cst_6 = arith.constant 2.000000e-01 : f32
    %14 = vector.broadcast %cst_6 : f32 to vector<8x1xf32>
    %15 = arith.addf %13, %14 : vector<8x1xf32>
    %cst_7 = arith.constant 0.000000e+00 : f32
    %16 = vector.broadcast %cst_7 : f32 to vector<8x1xf32>
    %17 = arith.maximumf %15, %16 : vector<8x1xf32>
    %18 = arith.cmpf olt, %12, %11 : vector<8x1xf32>
    %19 = arith.select %18, %12, %17 : vector<8x1xi1>, vector<8x1xf32>
    %c8_i32 = arith.constant 8 : i32
    %20 = arith.muli %arg0, %c8_i32 : i32
    %21 = tpu.iota {dimensions = array<i32: 0>} : vector<8x1xi32>
    %22 = vector.broadcast %20 : i32 to vector<8x1xi32>
    %23 = arith.addi %22, %21 : vector<8x1xi32>
    %c8_i32_8 = arith.constant 8 : i32
    %24 = vector.broadcast %c8_i32_8 : i32 to vector<8x1xi32>
    %25 = arith.cmpi slt, %23, %24 : vector<8x1xi32>
    %cst_9 = arith.constant 0.000000e+00 : f32
    %26 = vector.broadcast %cst_9 : f32 to vector<8x1xf32>
    %27 = arith.select %25, %19, %26 : vector<8x1xi1>, vector<8x1xf32>
    %28 = vector.shape_cast %27 : vector<8x1xf32> to vector<1x8x1xf32>
    %cst_10 = arith.constant dense<0.000000e+00> : vector<1xf32>
    %29 = vector.multi_reduction <add>, %28, %cst_10 [1, 2] : vector<1x8x1xf32> to vector<1xf32>
    %30 = vector.shape_cast %29 : vector<1xf32> to vector<1x1x1xf32>
    %31 = vector.extract %30[0, 0, 0] : f32 from vector<1x1x1xf32>
    %32 = vector.broadcast %31 : f32 to vector<1x1x128xf32>
    %c0_11 = arith.constant 0 : index
    %c0_12 = arith.constant 0 : index
    %c0_13 = arith.constant 0 : index
    %33 = vector.load %arg4[%c0_11, %c0_12, %c0_13] : memref<1x1x128xf32, #tpu.memory_space<vmem>>, vector<1x1x128xf32>
    tpu.vector_store %arg4[%c0_11, %c0_12, %c0_13], %32 {strides = array<i32>} : memref<1x1x128xf32, #tpu.memory_space<vmem>>, vector<1x1x128xf32>,
    return
  }
  func.func @transform_0(%arg0: i32) -> (i32, i32) {
    %c0_i32 = arith.constant 0 : i32
    %c0_i32_0 = arith.constant 0 : i32
    return %arg0, %c0_i32 : i32, i32
  }
  func.func @transform_1(%arg0: i32) -> (i32, i32) {
    %c0_i32 = arith.constant 0 : i32
    %c0_i32_0 = arith.constant 0 : i32
    return %arg0, %c0_i32 : i32, i32
  }
  func.func @transform_2(%arg0: i32) -> (i32, i32) {
    %c0_i32 = arith.constant 0 : i32
    %c0_i32_0 = arith.constant 0 : i32
    return %arg0, %c0_i32 : i32, i32
  }
  func.func @transform_3(%arg0: i32) -> (i32, i32, i32) {
    %c0_i32 = arith.constant 0 : i32
    %c0_i32_0 = arith.constant 0 : i32
    %c0_i32_1 = arith.constant 0 : i32
    return %arg0, %c0_i32, %c0_i32_0 : i32, i32, i32
  }
}

</mosaic_0001>

<llo_original>
// kernel: tpu_custom_call.1
$region0: #{tpu_custom_call.1}
  #allocation0 [shape = 'u32[]', space=smem, size = 0x4, offset = 0x4, fixed_abs, tag = 'smem constant byte address 0x4 - core index']
  #allocation1 [shape = 'u32[144,128]{1,0:T(1,128)}', space=vmem, size = 0x12000, scoped, tag = 'internal scratch']
  %s0 = inlined_call_operand.hbm [shape: f32[8,32], index: 0, kind: input, shape index: {}]
  %s1 = inlined_call_operand.hbm [shape: f32[8,32], index: 1, kind: input, shape index: {}]
  %s2 = inlined_call_operand.hbm [shape: f32[8,32], index: 2, kind: input, shape index: {}]
  %s3 = inlined_call_operand.hbm [shape: f32[1,1,128], index: 3, kind: output, shape index: {}]
  %s4 = sld [smem:[#allocation0]]
  $region34: #{tpu_custom_call.1} parent=0
    _
  %s6 = ssub.s32 1, %s4
  %s7 = scalar_select 0, %s6, %s4
  $region1: #{tpu_custom_call.1} parent=0
    #allocation2 [shape = 'u8[4096]{0}', space=vmem, size = 0x1000, scoped, tag = 'input window, operand 0, single buffered']
    #allocation3 [shape = 's32[1]{0}', space=sflag, size = 0x4, scoped, tag = 'scoped memory for tpu_custom_call.1']
    #allocation4 [shape = 's32[1]{0}', space=sflag, size = 0x4, scoped, tag = 'scoped memory for tpu_custom_call.1']
    #allocation5 [shape = 'u8[4096]{0}', space=vmem, size = 0x1000, scoped, tag = 'input window, operand 1, single buffered']
    #allocation6 [shape = 's32[1]{0}', space=sflag, size = 0x4, scoped, tag = 'scoped memory for tpu_custom_call.1']
    #allocation7 [shape = 'u8[4096]{0}', space=vmem, size = 0x1000, scoped, tag = 'input window, operand 2, single buffered']
    #allocation8 [shape = 'u8[512]{0}', space=vmem, size = 0x400, scoped, tag = 'output window, operand 0, single buffered']
    %8 = vsyncpa [#allocation3], 0
    %9 = vsyncpa [#allocation6], 0
    %10 = vsyncpa [#allocation4], 0
    // Predicated region
    $region2: #{tpu_custom_call.1} parent=1 // pred_check
      _
    $region3: #{tpu_custom_call.1} parent=1 // pred_check_branch
      %12 = sbr.rel (0) target = $region5
    $region4: #{tpu_custom_call.1} parent=1 // pred_region
      %s14 = ssub.s32 128, 128
      %15 = vsyncadd [#allocation3], %s14
      %s17 = sshll.u32 [#allocation2], 4
      %s18 = int_to_ptr.vmem [resolvable:$true] %s17
      %20 = dma.hbm_to_vmem [thread:$0]  %s0, 128, %s18, [#allocation3]
    $region5: #{tpu_custom_call.1} parent=1 // pred_fallthru
      _
    // Predicated region
    $region6: #{tpu_custom_call.1} parent=1 // pred_check
      _
    $region7: #{tpu_custom_call.1} parent=1 // pred_check_branch
      %22 = sbr.rel (0) target = $region9
    $region8: #{tpu_custom_call.1} parent=1 // pred_region
      %s24 = ssub.s32 128, 128
      %25 = vsyncadd [#allocation6], %s24
      %s27 = sshll.u32 [#allocation5], 4
      %s28 = int_to_ptr.vmem [resolvable:$true] %s27
      %30 = dma.hbm_to_vmem [thread:$0]  %s1, 128, %s28, [#allocation6]
    $region9: #{tpu_custom_call.1} parent=1 // pred_fallthru
      _
    // Predicated region
    $region10: #{tpu_custom_call.1} parent=1 // pred_check
      _
    $region11: #{tpu_custom_call.1} parent=1 // pred_check_branch
      %32 = sbr.rel (0) target = $region13
    $region12: #{tpu_custom_call.1} parent=1 // pred_region
      %s34 = ssub.s32 128, 128
      %35 = vsyncadd [#allocation6], %s34
      %s37 = sshll.u32 [#allocation7], 4
      %s38 = int_to_ptr.vmem [resolvable:$true] %s37
      %40 = dma.hbm_to_vmem [thread:$0]  %s2, 128, %s38, [#allocation6]
    $region13: #{tpu_custom_call.1} parent=1 // pred_fallthru
      _
    // Predicated region
    $region14: #{tpu_custom_call.1} parent=1 // pred_check
      _
    $region15: #{tpu_custom_call.1} parent=1 // pred_check_branch
      %42 = sbr.rel (0) target = $region17
    $region16: #{tpu_custom_call.1} parent=1 // pred_region
      %43 = dma.done [#allocation3], 128
    $region17: #{tpu_custom_call.1} parent=1 // pred_fallthru
      _
    // Predicated region
    $region18: #{tpu_custom_call.1} parent=1 // pred_check
      _
    $region19: #{tpu_custom_call.1} parent=1 // pred_check_branch
      %45 = sbr.rel (0) target = $region21
    $region20: #{tpu_custom_call.1} parent=1 // pred_region
      %46 = dma.done [#allocation6], 128
    $region21: #{tpu_custom_call.1} parent=1 // pred_fallthru
      _
    // Predicated region
    $region22: #{tpu_custom_call.1} parent=1 // pred_check
      _
    $region23: #{tpu_custom_call.1} parent=1 // pred_check_branch
      %48 = sbr.rel (0) target = $region25
    $region24: #{tpu_custom_call.1} parent=1 // pred_region
      %49 = dma.done [#allocation6], 128
    $region25: #{tpu_custom_call.1} parent=1 // pred_fallthru
      _
    %v50 = vld [vmem:[#allocation2] sm:$0xff]
    %v51 = vld [vmem:[#allocation5] sm:$0xff]
    %v52 = vld [vmem:[#allocation7] sm:$0xff]
    %v53 = vsub.f32 %v50, %v51
    %v54 = vsub.f32 %v50, %v52
    %v55 = vmul.f32 %v53, %v53
    %vm56 = vcmask 261120
    %v57 = vsel %vm56, %v55, 0.0
    %58 = vadd.xlane.f32.xlu0 %v57
    %v59 = vpop.xlane.xlu0 %58
    %v60 = vmul.f32 %v54, %v54
    %v61 = vsel %vm56, %v60, 0.0
    %62 = vadd.xlane.f32.xlu0 %v61
    %v63 = vpop.xlane.xlu0 %62
    %v64 = vrsqrt.pop %v59
    %v65 = vmul.f32 %v59, %v64
    %vm66 = vcmp.eq.f32.partialorder %v59, inf
    %v67 = vsel %vm66, %v59, %v65
    %vm68 = vcmp.eq.f32.partialorder %v59, 0.0
    %v69 = vand.u32 %v59, 2147483648
    %v70 = vsel %vm68, %v69, %v67
    %v71 = vrsqrt.pop %v63
    %v72 = vmul.f32 %v63, %v71
    %vm73 = vcmp.eq.f32.partialorder %v63, inf
    %v74 = vsel %vm73, %v63, %v72
    %vm75 = vcmp.eq.f32.partialorder %v63, 0.0
    %v76 = vand.u32 %v63, 2147483648
    %v77 = vsel %vm75, %v76, %v74
    %v78 = vsub.f32 %v70, %v77
    %v79 = vadd.f32 %v78, 0.2
    %v80 = vmax.f32 %v79, 0.0
    %vm81 = vcmp.lt.f32.partialorder %v77, %v70
    %v82 = vsel %vm81, %v77, %v80
    %s83 = smul.u32 0, 8
    %v84 = vlaneseq
    %v85 = vshrl.u32 %v84, 7
    %v86 = vstv %s83
    %v87 = vadd.s32 %v86, %v85
    %vm88 = vcmp.lt.s32.totalorder %v87, 8
    %v89 = vsel %vm88, %v82, 0.0
    %vm90 = vcmask 7168
    %v91 = vsel %vm90, %v89, 0.0
    %92 = vadd.xlane.f32.xlu0 %v91
    %v93 = vpop.xlane.xlu0 %92
    %v94 = vrot.slane %v93, 4
    %v95 = vadd.f32 %v93, %v94
    %v96 = vrot.slane %v95, 2
    %v97 = vadd.f32 %v95, %v96
    %v98 = vrot.slane %v97, 1
    %v99 = vadd.f32 %v97, %v98
    %s100 = vtos %v99
    %v101 = vstv %s100
    %102 = vst [vmem:[#allocation8] sm:$0x1] %v101
    // Predicated region
    $region26: #{tpu_custom_call.1} parent=1 // pred_check
      _
    $region27: #{tpu_custom_call.1} parent=1 // pred_check_branch
      %104 = sbr.rel (0) target = $region29
    $region28: #{tpu_custom_call.1} parent=1 // pred_region
      %s106 = ssub.s32 16, 16
      %107 = vsyncadd [#allocation4], %s106
      %s109 = sshll.u32 [#allocation8], 4
      %s110 = int_to_ptr.vmem [resolvable:$true] %s109
      %112 = dma.vmem_to_hbm [thread:$0]  %s110, 16, %s3, [#allocation4]
    $region29: #{tpu_custom_call.1} parent=1 // pred_fallthru
      _
    // Predicated region
    $region30: #{tpu_custom_call.1} parent=1 // pred_check
      _
    $region31: #{tpu_custom_call.1} parent=1 // pred_check_branch
      %114 = sbr.rel (0) target = $region33
    $region32: #{tpu_custom_call.1} parent=1 // pred_region
      %115 = dma.done [#allocation4], 16
    $region33: #{tpu_custom_call.1} parent=1 // pred_fallthru
      _
    %116 = vsyncpa [#allocation3], 1
    %117 = vsyncpa [#allocation6], 1
    %118 = vsyncpa [#allocation4], 1

</llo_original>
